<compile_context>
chip_gen: v6e
topology: v6e:2x2x1
jax: 0.10.0
libtpu: 0.0.40
codegen_flags: <defaults>
</compile_context>

<pallas_src>
import jax
import jax.numpy as jnp
from jax.experimental import pallas as pl
from jax.experimental.pallas import tpu as pltpu

_LANE = 128
_BATCH_ALIGN = 16   # bf16 minimum sublane tile (covers f32's 8 as well)


def _round_up(x, m):
    return (x + m - 1) // m * m


def _actor_kernel(x_ref, w1_ref, b1_ref, w2_ref, b2_ref, w3_ref, b3_ref, o_ref):
    # x_ref : (TB, K)   f32  flattened (C,H,W)-major input patch, K = C*5*5
    # w1_ref: (K, 32)   bf16 conv weight flattened & transposed
    # b1_ref: (1, 32)   f32
    # w2_ref: (32, 16)  bf16 ; b2_ref: (1, 16) f32
    # w3_ref: (16, Np)  bf16 zero-padded cols ; b3_ref: (1, Np) f32 zero-padded
    # o_ref : (TB, Np)  bf16 lane-dense logits; columns >= action_dim are padding
    x = x_ref[...].astype(jnp.bfloat16)   # in-kernel cast: no wrapper pad/cast pass

    # Conv2d(k=5, s=1) over a 5x5 input == one matmul; Tanh; Dropout = identity (eval).
    h1 = jnp.tanh(
        jnp.dot(x, w1_ref[...], preferred_element_type=jnp.float32) + b1_ref[...]
    )
    # Linear(32, 16) + Tanh  (bf16 MXU inputs, f32 accumulate, f32 elementwise)
    h2 = jnp.tanh(
        jnp.dot(h1.astype(jnp.bfloat16), w2_ref[...],
                preferred_element_type=jnp.float32) + b2_ref[...]
    )
    # Linear(16, action_dim), padded to Np lanes
    out = jnp.dot(h2.astype(jnp.bfloat16), w3_ref[...],
                  preferred_element_type=jnp.float32) + b3_ref[...]
    o_ref[...] = out.astype(o_ref.dtype)


def pack_params(params):
    """One-time packing: reshape/transpose/pad/cast weights out of the hot path."""
    w_conv, b_conv, w_fc1, b_fc1, w_fc2, b_fc2 = params
    n_hidden1 = w_conv.shape[0]                                 # 32
    K = w_conv.shape[1] * w_conv.shape[2] * w_conv.shape[3]     # C*5*5
    A = w_fc2.shape[0]
    Np = _round_up(A, _LANE)

    w1 = w_conv.reshape(n_hidden1, -1).T.astype(jnp.bfloat16)   # (K, 32)
    b1 = b_conv.reshape(1, -1).astype(jnp.float32)              # (1, 32)
    w2 = w_fc1.T.astype(jnp.bfloat16)                           # (32, 16)
    b2 = b_fc1.reshape(1, -1).astype(jnp.float32)               # (1, 16)
    w3 = jnp.pad(w_fc2.T, ((0, 0), (0, Np - A))).astype(jnp.bfloat16)         # (16, Np)
    b3 = jnp.pad(b_fc2.reshape(1, -1), ((0, 0), (0, Np - A))).astype(jnp.float32)
    return (w1, b1, w2, b2, w3, b3), (K, A, Np)


def actor_forward_padded(state_nchw, packed_params, meta, *, tb=4096):
    """Hot-path API.

    Returns lane-dense padded bf16 logits of shape (Bp, Np) where Bp = B rounded
    up to 16 and Np = action_dim rounded up to 128.  Rows >= B and columns >= A
    are padding; downstream consumers (softmax / argmax / sampling) should mask
    them (or be fused) instead of forcing a strided slice copy over HBM.
    """
    w1, b1, w2, b2, w3, b3 = packed_params
    K, A, Np = meta
    B, C, H, W = state_nchw.shape
    assert (H, W) == (5, 5), "module requires 5x5 spatial input (conv->1x1->Flatten)"
    assert C * H * W == K, "state channel count does not match packed params"

    Bp = _round_up(B, _BATCH_ALIGN)
    x = state_nchw.reshape(B, K)                 # contiguous reshape: no HBM pass
    if Bp != B:                                  # only a tiny (<16 row) batch pad,
        x = jnp.pad(x, ((0, Bp - B), (0, 0)))    # and only when actually needed

    # Batch tile: large enough to amortize ~0.35us/step overhead, but at least
    # 2 grid steps whenever possible so v7x's two TensorCores both get work on
    # the "parallel" batch axis.  Multiple of 16 (bf16 sublane packing).
    TB = min(_round_up(tb, _BATCH_ALIGN),
             max(_BATCH_ALIGN, _round_up(pl.cdiv(Bp, 2), _BATCH_ALIGN)))
    nb = pl.cdiv(Bp, TB)

    def resident(shape):
        # Same block every grid step -> stays in VMEM, no re-DMA of weights.
        return pl.BlockSpec(shape, lambda i: (0, 0))

    flops = 2 * Bp * (K * 32 + 32 * 16 + 16 * Np)
    transcendentals = Bp * (32 + 16)
    bytes_accessed = (
        Bp * K * 4                                   # x in (f32)
        + Bp * Np * 2                                # logits out (bf16)
        + (w1.size + w2.size + w3.size) * 2          # bf16 weights
        + (b1.size + b2.size + b3.size) * 4          # f32 biases
    )

    out = pl.pallas_call(
        _actor_kernel,
        out_shape=jax.ShapeDtypeStruct((Bp, Np), jnp.bfloat16),
        grid=(nb,),
        in_specs=[
            pl.BlockSpec((TB, K), lambda i: (i, 0)),    # streamed batch tile (f32)
            resident(w1.shape), resident(b1.shape),     # weights stay in VMEM
            resident(w2.shape), resident(b2.shape),
            resident(w3.shape), resident(b3.shape),
        ],
        out_specs=pl.BlockSpec((TB, Np), lambda i: (i, 0)),
        compiler_params=pltpu.CompilerParams(
            dimension_semantics=("parallel",),          # shard batch across TCs
            vmem_limit_bytes=32 * 1024 * 1024,          # <= v7x 64 MiB physical
        ),
        cost_estimate=pl.CostEstimate(
            flops=flops,
            transcendentals=transcendentals,
            bytes_accessed=bytes_accessed,
        ),
    )(x, w1, b1, w2, b2, w3, b3)
    return out


def actor_forward(state_nchw, packed_params, meta, *, tb=4096):
    """Drop-in forward(): (B, action_dim) f32 logits matching the PyTorch module.

    Note: the trailing slice/cast is a separate XLA copy over the padded output;
    prefer actor_forward_padded + masking (or fusing the softmax/sampler) on the
    performance-critical path.
    """
    K, A, Np = meta
    B = state_nchw.shape[0]
    out = actor_forward_padded(state_nchw, packed_params, meta, tb=tb)
    return out[:B, :A].astype(jnp.float32)


def init_params(key, state_dim, action_dim):
    """Deterministic synthetic parameters matching the PyTorch module's shapes."""
    k1, k2, k3 = jax.random.split(key, 3)
    w_conv = 0.1 * jax.random.normal(k1, (32, state_dim, 5, 5), jnp.float32)
    b_conv = jnp.zeros((32,), jnp.float32)
    w_fc1 = 0.1 * jax.random.normal(k2, (16, 32), jnp.float32)
    b_fc1 = jnp.zeros((16,), jnp.float32)
    # layer_norm(std=0.1, bias=1e-6) emulated with small scale / tiny bias
    w_fc2 = 0.1 * jax.random.normal(k3, (action_dim, 16), jnp.float32)
    b_fc2 = jnp.full((action_dim,), 1e-6, jnp.float32)
    return (w_conv, b_conv, w_fc1, b_fc1, w_fc2, b_fc2)


def actor_forward_ref(state_nchw, params):
    """Pure-JAX f32 reference (same math, no Pallas) for correctness check."""
    w_conv, b_conv, w_fc1, b_fc1, w_fc2, b_fc2 = params
    B, C, H, W = state_nchw.shape
    x = state_nchw.reshape(B, C * H * W)
    h1 = jnp.tanh(x @ w_conv.reshape(32, -1).T + b_conv)
    h2 = jnp.tanh(h1 @ w_fc1.T + b_fc1)
    return h2 @ w_fc2.T + b_fc2


if __name__ == "__main__":
    key = jax.random.PRNGKey(0)
    k_state, k_state2, k_param = jax.random.split(key, 3)

    state_dim, action_dim = 4, 6
    params = init_params(k_param, state_dim, action_dim)
    packed, meta = pack_params(params)          # one-time pre-pack (hot-path free)

    # Small batch (single grid step, padded to the 16-row granularity).
    state = jax.random.normal(k_state, (2, state_dim, 5, 5), jnp.float32)
    logits = jax.block_until_ready(actor_forward(state, packed, meta))
    ref = actor_forward_ref(state, params)
    assert logits.shape == (2, action_dim)
    assert jnp.allclose(logits, ref, atol=5e-2, rtol=5e-2), "mismatch vs reference (B=2)"

    # Larger batch exercising the multi-step pipelined / megacore batch grid.
    state_big = jax.random.normal(k_state2, (512, state_dim, 5, 5), jnp.float32)
    logits_big = jax.block_until_ready(actor_forward(state_big, packed, meta))
    ref_big = actor_forward_ref(state_big, params)
    assert logits_big.shape == (512, action_dim)
    assert jnp.allclose(logits_big, ref_big, atol=5e-2, rtol=5e-2), "mismatch vs reference (B=512)"

    print("KERNEL_OK")
</pallas_src>

<mosaic_0001>
module attributes {stable_mosaic.version = 11 : i64} {
  func.func @_actor_kernel(%arg0: i32, %arg1: memref<16x100xf32, #tpu.memory_space<vmem>>, %arg2: memref<100x32xbf16, #tpu.memory_space<vmem>>, %arg3: memref<1x32xf32, #tpu.memory_space<vmem>>, %arg4: memref<32x16xbf16, #tpu.memory_space<vmem>>, %arg5: memref<1x16xf32, #tpu.memory_space<vmem>>, %arg6: memref<16x128xbf16, #tpu.memory_space<vmem>>, %arg7: memref<1x128xf32, #tpu.memory_space<vmem>>, %arg8: memref<16x128xbf16, #tpu.memory_space<vmem>>) attributes {dimension_semantics = [#tpu.dimension_semantics<parallel>], iteration_bounds = array<i64: 1>, scalar_prefetch = 0 : i64, scratch_operands = 0 : i64, tpu.core_type = #tpu.core_type<tc>, window_params = [{transform_indices = @transform_0, window_bounds = array<i64: 16, 100>}, {pipeline_mode = #tpu.pipeline_mode<synchronous>, transform_indices = @transform_1, window_bounds = array<i64: 100, 32>}, {pipeline_mode = #tpu.pipeline_mode<synchronous>, transform_indices = @transform_2, window_bounds = array<i64: 1, 32>}, {pipeline_mode = #tpu.pipeline_mode<synchronous>, transform_indices = @transform_3, window_bounds = array<i64: 32, 16>}, {pipeline_mode = #tpu.pipeline_mode<synchronous>, transform_indices = @transform_4, window_bounds = array<i64: 1, 16>}, {pipeline_mode = #tpu.pipeline_mode<synchronous>, transform_indices = @transform_5, window_bounds = array<i64: 16, 128>}, {pipeline_mode = #tpu.pipeline_mode<synchronous>, transform_indices = @transform_6, window_bounds = array<i64: 1, 128>}, {transform_indices = @transform_7, window_bounds = array<i64: 16, 128>}]} {
    %c0 = arith.constant 0 : index
    %c0_0 = arith.constant 0 : index
    %0 = vector.load %arg1[%c0, %c0_0] : memref<16x100xf32, #tpu.memory_space<vmem>>, vector<16x100xf32>
    %1 = arith.truncf %0 : vector<16x100xf32> to vector<16x100xbf16>
    %c0_1 = arith.constant 0 : index
    %c0_2 = arith.constant 0 : index
    %2 = vector.load %arg2[%c0_1, %c0_2] : memref<100x32xbf16, #tpu.memory_space<vmem>>, vector<100x32xbf16>
    %cst = arith.constant dense<0.000000e+00> : vector<16x32xf32>
    %3 = tpu.matmul %1, %2, %cst {dimension_numbers = #tpu.dot_dimension_numbers<[1], [0], [0], [1], [0, 0, 1, 1], [], []>} : vector<16x100xbf16>, vector<100x32xbf16>, vector<16x32xf32> -> vector<16x32xf32>
    %c0_3 = arith.constant 0 : index
    %c0_4 = arith.constant 0 : index
    %4 = vector.load %arg3[%c0_3, %c0_4] : memref<1x32xf32, #tpu.memory_space<vmem>>, vector<1x32xf32>
    %5 = vector.broadcast %4 : vector<1x32xf32> to vector<16x32xf32>
    %6 = arith.addf %3, %5 : vector<16x32xf32>
    %7 = math.tanh %6 : vector<16x32xf32>
    %8 = arith.truncf %7 : vector<16x32xf32> to vector<16x32xbf16>
    %c0_5 = arith.constant 0 : index
    %c0_6 = arith.constant 0 : index
    %9 = vector.load %arg4[%c0_5, %c0_6] : memref<32x16xbf16, #tpu.memory_space<vmem>>, vector<32x16xbf16>
    %cst_7 = arith.constant dense<0.000000e+00> : vector<16x16xf32>
    %10 = tpu.matmul %8, %9, %cst_7 {dimension_numbers = #tpu.dot_dimension_numbers<[1], [0], [0], [1], [0, 0, 1, 1], [], []>} : vector<16x32xbf16>, vector<32x16xbf16>, vector<16x16xf32> -> vector<16x16xf32>
    %c0_8 = arith.constant 0 : index
    %c0_9 = arith.constant 0 : index
    %11 = vector.load %arg5[%c0_8, %c0_9] : memref<1x16xf32, #tpu.memory_space<vmem>>, vector<1x16xf32>
    %12 = vector.broadcast %11 : vector<1x16xf32> to vector<16x16xf32>
    %13 = arith.addf %10, %12 : vector<16x16xf32>
    %14 = math.tanh %13 : vector<16x16xf32>
    %15 = arith.truncf %14 : vector<16x16xf32> to vector<16x16xbf16>
    %c0_10 = arith.constant 0 : index
    %c0_11 = arith.constant 0 : index
    %16 = vector.load %arg6[%c0_10, %c0_11] : memref<16x128xbf16, #tpu.memory_space<vmem>>, vector<16x128xbf16>
    %cst_12 = arith.constant dense<0.000000e+00> : vector<16x128xf32>
    %17 = tpu.matmul %15, %16, %cst_12 {dimension_numbers = #tpu.dot_dimension_numbers<[1], [0], [0], [1], [0, 0, 1, 1], [], []>} : vector<16x16xbf16>, vector<16x128xbf16>, vector<16x128xf32> -> vector<16x128xf32>
    %c0_13 = arith.constant 0 : index
    %c0_14 = arith.constant 0 : index
    %18 = vector.load %arg7[%c0_13, %c0_14] : memref<1x128xf32, #tpu.memory_space<vmem>>, vector<1x128xf32>
    %19 = vector.broadcast %18 : vector<1x128xf32> to vector<16x128xf32>
    %20 = arith.addf %17, %19 : vector<16x128xf32>
    %21 = arith.truncf %20 : vector<16x128xf32> to vector<16x128xbf16>
    %c0_15 = arith.constant 0 : index
    %c0_16 = arith.constant 0 : index
    %22 = vector.load %arg8[%c0_15, %c0_16] : memref<16x128xbf16, #tpu.memory_space<vmem>>, vector<16x128xbf16>
    tpu.vector_store %arg8[%c0_15, %c0_16], %21 {strides = array<i32>} : memref<16x128xbf16, #tpu.memory_space<vmem>>, vector<16x128xbf16>,
    return
  }
  func.func @transform_0(%arg0: i32) -> (i32, i32) {
    %c0_i32 = arith.constant 0 : i32
    %c0_i32_0 = arith.constant 0 : i32
    return %arg0, %c0_i32 : i32, i32
  }
  func.func @transform_1(%arg0: i32) -> (i32, i32) {
    %c0_i32 = arith.constant 0 : i32
    %c0_i32_0 = arith.constant 0 : i32
    %c0_i32_1 = arith.constant 0 : i32
    return %c0_i32, %c0_i32_0 : i32, i32
  }
  func.func @transform_2(%arg0: i32) -> (i32, i32) {
    %c0_i32 = arith.constant 0 : i32
    %c0_i32_0 = arith.constant 0 : i32
    %c0_i32_1 = arith.constant 0 : i32
    return %c0_i32, %c0_i32_0 : i32, i32
  }
  func.func @transform_3(%arg0: i32) -> (i32, i32) {
    %c0_i32 = arith.constant 0 : i32
    %c0_i32_0 = arith.constant 0 : i32
    %c0_i32_1 = arith.constant 0 : i32
    return %c0_i32, %c0_i32_0 : i32, i32
  }
  func.func @transform_4(%arg0: i32) -> (i32, i32) {
    %c0_i32 = arith.constant 0 : i32
    %c0_i32_0 = arith.constant 0 : i32
    %c0_i32_1 = arith.constant 0 : i32
    return %c0_i32, %c0_i32_0 : i32, i32
  }
  func.func @transform_5(%arg0: i32) -> (i32, i32) {
    %c0_i32 = arith.constant 0 : i32
    %c0_i32_0 = arith.constant 0 : i32
    %c0_i32_1 = arith.constant 0 : i32
    return %c0_i32, %c0_i32_0 : i32, i32
  }
  func.func @transform_6(%arg0: i32) -> (i32, i32) {
    %c0_i32 = arith.constant 0 : i32
    %c0_i32_0 = arith.constant 0 : i32
    %c0_i32_1 = arith.constant 0 : i32
    return %c0_i32, %c0_i32_0 : i32, i32
  }
  func.func @transform_7(%arg0: i32) -> (i32, i32) {
    %c0_i32 = arith.constant 0 : i32
    %c0_i32_0 = arith.constant 0 : i32
    return %arg0, %c0_i32 : i32, i32
  }
}

</mosaic_0001>

<llo_original>
// kernel: tpu_custom_call.1
$region0: #{tpu_custom_call.1}
  #allocation0 [shape = 'u32[]', space=smem, size = 0x4, offset = 0x4, fixed_abs, tag = 'smem constant byte address 0x4 - core index']
  #allocation1 [shape = 'u32[144,128]{1,0:T(1,128)}', space=vmem, size = 0x12000, scoped, tag = 'internal scratch']
  %s0 = inlined_call_operand.vmem [shape: f32[16,100], index: 0, kind: input, shape index: {}]
  %s1 = inlined_call_operand.vmem [shape: bf16[100,32], index: 1, kind: input, shape index: {}]
  %s2 = inlined_call_operand.vmem [shape: f32[1,32], index: 2, kind: input, shape index: {}]
  %s3 = inlined_call_operand.vmem [shape: bf16[32,16], index: 3, kind: input, shape index: {}]
  %s4 = inlined_call_operand.vmem [shape: f32[1,16], index: 4, kind: input, shape index: {}]
  %s5 = inlined_call_operand.vmem [shape: bf16[16,128], index: 5, kind: input, shape index: {}]
  %s6 = inlined_call_operand.vmem [shape: f32[1,128], index: 6, kind: input, shape index: {}]
  %s7 = inlined_call_operand.hbm [shape: bf16[16,128], index: 7, kind: output, shape index: {}]
  %s8 = sld [smem:[#allocation0]]
  $region38: #{tpu_custom_call.1} parent=0
    _
  %s10 = ssub.s32 1, %s8
  %s11 = scalar_select 0, %s10, %s8
  $region1: #{tpu_custom_call.1} parent=0
    #allocation2 [shape = 'u8[4096]{0}', space=vmem, size = 0x1000, scoped, tag = 'output window, operand 0, single buffered']
    #allocation3 [shape = 's32[1]{0}', space=sflag, size = 0x4, scoped, tag = 'scoped memory for tpu_custom_call.1']
    %12 = vsyncpa [#allocation3], 0
    // Predicated region
    $region2: #{tpu_custom_call.1} parent=1 // pred_check
      _
    $region3: #{tpu_custom_call.1} parent=1 // pred_check_branch
      %14 = sbr.rel (0) target = $region5
    $region4: #{tpu_custom_call.1} parent=1 // pred_region
      _
    $region5: #{tpu_custom_call.1} parent=1 // pred_fallthru
      _
    // Predicated region
    $region6: #{tpu_custom_call.1} parent=1 // pred_check
      _
    $region7: #{tpu_custom_call.1} parent=1 // pred_check_branch
      %16 = sbr.rel (0) target = $region9
    $region8: #{tpu_custom_call.1} parent=1 // pred_region
      _
    $region9: #{tpu_custom_call.1} parent=1 // pred_fallthru
      _
    // Predicated region
    $region10: #{tpu_custom_call.1} parent=1 // pred_check
      _
    $region11: #{tpu_custom_call.1} parent=1 // pred_check_branch
      %18 = sbr.rel (0) target = $region13
    $region12: #{tpu_custom_call.1} parent=1 // pred_region
      _
    $region13: #{tpu_custom_call.1} parent=1 // pred_fallthru
      _
    // Predicated region
    $region14: #{tpu_custom_call.1} parent=1 // pred_check
      _
    $region15: #{tpu_custom_call.1} parent=1 // pred_check_branch
      %20 = sbr.rel (0) target = $region17
    $region16: #{tpu_custom_call.1} parent=1 // pred_region
      _
    $region17: #{tpu_custom_call.1} parent=1 // pred_fallthru
      _
    // Predicated region
    $region18: #{tpu_custom_call.1} parent=1 // pred_check
      _
    $region19: #{tpu_custom_call.1} parent=1 // pred_check_branch
      %22 = sbr.rel (0) target = $region21
    $region20: #{tpu_custom_call.1} parent=1 // pred_region
      _
    $region21: #{tpu_custom_call.1} parent=1 // pred_fallthru
      _
    // Predicated region
    $region22: #{tpu_custom_call.1} parent=1 // pred_check
      _
    $region23: #{tpu_custom_call.1} parent=1 // pred_check_branch
      %24 = sbr.rel (0) target = $region25
    $region24: #{tpu_custom_call.1} parent=1 // pred_region
      _
    $region25: #{tpu_custom_call.1} parent=1 // pred_fallthru
      _
    // Predicated region
    $region26: #{tpu_custom_call.1} parent=1 // pred_check
      _
    $region27: #{tpu_custom_call.1} parent=1 // pred_check_branch
      %26 = sbr.rel (0) target = $region29
    $region28: #{tpu_custom_call.1} parent=1 // pred_region
      _
    $region29: #{tpu_custom_call.1} parent=1 // pred_fallthru
      _
    %v28 = vld [vmem:[%s0] sm:$0xff]
    %v29 = vld [vmem:[%s0 + $0x8] sm:$0xff]
    %v30 = vpack.c.bf16 %v29, %v28
    %v31 = vld [vmem:[%s1] sm:$0xf]
    %v32 = vld [vmem:[%s1 + $0x4] sm:$0xf]
    %v33 = vld [vmem:[%s1 + $0x8] sm:$0xf]
    %v34 = vld [vmem:[%s1 + $0xc] sm:$0xf]
    %v35 = vld [vmem:[%s1 + $0x10] sm:$0xf]
    %v36 = vld [vmem:[%s1 + $0x14] sm:$0xf]
    %v37 = vld [vmem:[%s1 + $0x18] sm:$0xf]
    %v38 = vld [vmem:[%s1 + $0x1c] sm:$0xf]
    %v39 = vld [vmem:[%s1 + $0x20] sm:$0xf]
    %v40 = vld [vmem:[%s1 + $0x24] sm:$0xf]
    %v41 = vld [vmem:[%s1 + $0x28] sm:$0xf]
    %v42 = vld [vmem:[%s1 + $0x2c] sm:$0xf]
    %v43 = vld [vmem:[%s1 + $0x30] sm:$0x3]
    %v44 = vld [vmem:[%s2] sm:$0x1]
    %v46 = vlaneseq
    %v47 = vshrl.u32 %v46, 7
    %v48 = vsub.s32 0, %v47
    %v49 = vrot.slane %v44, %v48
    %v64 = vunpack.c.l.b16 %v31
    %v65 = vunpack.c.l.b16 %v32
    %v66 = vunpack.c.l.b16 %v33
    %v67 = vunpack.c.l.b16 %v34
    %v68 = vunpack.c.l.b16 %v35
    %v69 = vunpack.c.l.b16 %v36
    %v70 = vunpack.c.l.b16 %v37
    %v71 = vunpack.c.l.b16 %v38
    %v72 = vunpack.c.l.b16 %v39
    %v73 = vunpack.c.l.b16 %v40
    %v74 = vunpack.c.l.b16 %v41
    %v75 = vunpack.c.l.b16 %v42
    %v76 = vunpack.c.l.b16 %v43
    %v77 = vpack.c.b16 %v65, %v64
    %v78 = vpack.c.b16 %v67, %v66
    %v79 = vpack.c.b16 %v69, %v68
    %v80 = vpack.c.b16 %v71, %v70
    %v81 = vpack.c.b16 %v73, %v72
    %v82 = vpack.c.b16 %v75, %v74
    %v83 = vpack.c.b16 %v76, %v76
    %vm90 = vcmask 818176
    %v92 = vsel %vm90, %v30, 0
    %vm94 = vcmask 1041408
    %v96 = vsel %vm94, %v83, 0
    %98 = vmatprep.subr.bf16.mxu0 0
    %99 = vmatpush1.bf16.msra.mxu0 0
    %100 = vmatprep.subr.bf16.mxu0 0
    %101 = vmatpush1.bf16.msra.mxu0 %v96
    %102 = vmatprep.subr.bf16.mxu0 0
    %103 = vmatpush1.bf16.msra.mxu0 %v82
    %104 = vmatprep.subr.bf16.mxu0 0
    %105 = vmatpush1.bf16.msra.mxu0 %v81
    %106 = vmatprep.subr.bf16.mxu0 0
    %107 = vmatpush1.bf16.msra.mxu0 %v80
    %108 = vmatprep.subr.bf16.mxu0 0
    %109 = vmatpush1.bf16.msra.mxu0 %v79
    %110 = vmatprep.subr.bf16.mxu0 0
    %111 = vmatpush1.bf16.msra.mxu0 %v78
    %112 = vmatprep.subr.bf16.mxu0 0
    %113 = vmatpush1.bf16.msra.mxu0 %v77
    %114 = vmatprep.subr.bf16.mxu0 0
    %115 = vmatpush2.bf16.msra.mxu0 0
    %116 = vmatprep.subr.bf16.mxu0 0
    %117 = vmatpush2.bf16.msra.mxu0 0
    %118 = vmatprep.subr.bf16.mxu0 0
    %119 = vmatpush2.bf16.msra.mxu0 0
    %120 = vmatprep.subr.bf16.mxu0 0
    %121 = vmatpush2.bf16.msra.mxu0 0
    %122 = vmatprep.subr.bf16.mxu0 0
    %123 = vmatpush2.bf16.msra.mxu0 0
    %124 = vmatprep.subr.bf16.mxu0 0
    %125 = vmatpush2.bf16.msra.mxu0 0
    %126 = vmatprep.subr.bf16.mxu0 0
    %127 = vmatpush2.bf16.msra.mxu0 0
    %128 = vmatprep.subr.bf16.mxu0 0
    %129 = vmatpush2.bf16.msra.mxu0 0
    %130 = vmatprep.mubr.bf16.mxu0 0
    %131 = vmatmul.mubr.bf16.gmra.mxu0 %v92
    %v132 = vpop.f32.mrf.mxu0
    %v133 = vadd.f32 %v49, %v132
    %v134 = vpop.f32.mrf.mxu0
    %v135 = vpop.f32.mrf.mxu0
    %v136 = vadd.f32 %v49, %v135
    %v137 = vpop.f32.mrf.mxu0
    %138 = vdwg.mxu0
    %v139 = vtanh.pop %v133
    %v140 = vtanh.pop %v136
    %v141 = vpack.c.bf16 %v140, %v139
    %v142 = vld [vmem:[%s3] sm:$0xf]
    %v143 = vld [vmem:[%s3 + $0x4] sm:$0xf]
    %v144 = vld [vmem:[%s3 + $0x8] sm:$0xf]
    %v145 = vld [vmem:[%s3 + $0xc] sm:$0xf]
    %v146 = vld [vmem:[%s4] sm:$0x1]
    %v148 = vlaneseq
    %v149 = vshrl.u32 %v148, 7
    %v150 = vsub.s32 0, %v149
    %v151 = vrot.slane %v146, %v150
    %v157 = vunpack.c.l.b16 %v142
    %v158 = vunpack.c.l.b16 %v143
    %v159 = vunpack.c.l.b16 %v144
    %v160 = vunpack.c.l.b16 %v145
    %v161 = vpack.c.b16 %v158, %v157
    %v162 = vpack.c.b16 %v160, %v159
    %vm165 = vcmask 261120
    %v167 = vsel %vm165, %v141, 0
    %169 = vmatprep.subr.bf16.mxu0 0
    %170 = vmatpush1.bf16.msra.mxu0 0
    %171 = vmatprep.subr.bf16.mxu0 0
    %172 = vmatpush1.bf16.msra.mxu0 0
    %173 = vmatprep.subr.bf16.mxu0 0
    %174 = vmatpush1.bf16.msra.mxu0 0
    %175 = vmatprep.subr.bf16.mxu0 0
    %176 = vmatpush1.bf16.msra.mxu0 0
    %177 = vmatprep.subr.bf16.mxu0 0
    %178 = vmatpush1.bf16.msra.mxu0 0
    %179 = vmatprep.subr.bf16.mxu0 0
    %180 = vmatpush1.bf16.msra.mxu0 0
    %181 = vmatprep.subr.bf16.mxu0 0
    %182 = vmatpush1.bf16.msra.mxu0 %v162
    %183 = vmatprep.subr.bf16.mxu0 0
    %184 = vmatpush1.bf16.msra.mxu0 %v161
    %185 = vmatprep.subr.bf16.mxu0 0
    %186 = vmatpush2.bf16.msra.mxu0 0
    %187 = vmatprep.subr.bf16.mxu0 0
    %188 = vmatpush2.bf16.msra.mxu0 0
    %189 = vmatprep.subr.bf16.mxu0 0
    %190 = vmatpush2.bf16.msra.mxu0 0
    %191 = vmatprep.subr.bf16.mxu0 0
    %192 = vmatpush2.bf16.msra.mxu0 0
    %193 = vmatprep.subr.bf16.mxu0 0
    %194 = vmatpush2.bf16.msra.mxu0 0
    %195 = vmatprep.subr.bf16.mxu0 0
    %196 = vmatpush2.bf16.msra.mxu0 0
    %197 = vmatprep.subr.bf16.mxu0 0
    %198 = vmatpush2.bf16.msra.mxu0 0
    %199 = vmatprep.subr.bf16.mxu0 0
    %200 = vmatpush2.bf16.msra.mxu0 0
    %201 = vmatprep.mubr.bf16.mxu0 0
    %202 = vmatmul.mubr.bf16.gmra.mxu0 %v167
    %v203 = vpop.f32.mrf.mxu0
    %v204 = vadd.f32 %v151, %v203
    %v205 = vpop.f32.mrf.mxu0
    %v206 = vpop.f32.mrf.mxu0
    %v207 = vadd.f32 %v151, %v206
    %v208 = vpop.f32.mrf.mxu0
    %209 = vdwg.mxu0
    %v210 = vtanh.pop %v204
    %v211 = vtanh.pop %v207
    %v212 = vpack.c.bf16 %v211, %v210
    %v213 = vld [vmem:[%s5] sm:$0xf]
    %v214 = vld [vmem:[%s5 + $0x4] sm:$0xf]
    %v215 = vld [vmem:[%s6] sm:$0x1]
    %v217 = vlaneseq
    %v218 = vshrl.u32 %v217, 7
    %v219 = vsub.s32 0, %v218
    %v220 = vrot.slane %v215, %v219
    %v224 = vunpack.c.l.b16 %v213
    %v225 = vunpack.c.l.b16 %v214
    %v226 = vpack.c.b16 %v225, %v224
    %vm228 = vcmask 130048
    %v230 = vsel %vm228, %v212, 0
    %232 = vmatprep.subr.bf16.mxu0 0
    %233 = vmatpush1.bf16.msra.mxu0 0
    %234 = vmatprep.subr.bf16.mxu0 0
    %235 = vmatpush1.bf16.msra.mxu0 0
    %236 = vmatprep.subr.bf16.mxu0 0
    %237 = vmatpush1.bf16.msra.mxu0 0
    %238 = vmatprep.subr.bf16.mxu0 0
    %239 = vmatpush1.bf16.msra.mxu0 0
    %240 = vmatprep.subr.bf16.mxu0 0
    %241 = vmatpush1.bf16.msra.mxu0 0
    %242 = vmatprep.subr.bf16.mxu0 0
    %243 = vmatpush1.bf16.msra.mxu0 0
    %244 = vmatprep.subr.bf16.mxu0 0
    %245 = vmatpush1.bf16.msra.mxu0 0
    %246 = vmatprep.subr.bf16.mxu0 0
    %247 = vmatpush1.bf16.msra.mxu0 %v226
    %248 = vmatprep.subr.bf16.mxu0 0
    %249 = vmatpush2.bf16.msra.mxu0 0
    %250 = vmatprep.subr.bf16.mxu0 0
    %251 = vmatpush2.bf16.msra.mxu0 0
    %252 = vmatprep.subr.bf16.mxu0 0
    %253 = vmatpush2.bf16.msra.mxu0 0
    %254 = vmatprep.subr.bf16.mxu0 0
    %255 = vmatpush2.bf16.msra.mxu0 0
    %256 = vmatprep.subr.bf16.mxu0 0
    %257 = vmatpush2.bf16.msra.mxu0 0
    %258 = vmatprep.subr.bf16.mxu0 0
    %259 = vmatpush2.bf16.msra.mxu0 0
    %260 = vmatprep.subr.bf16.mxu0 0
    %261 = vmatpush2.bf16.msra.mxu0 0
    %262 = vmatprep.subr.bf16.mxu0 0
    %263 = vmatpush2.bf16.msra.mxu0 0
    %264 = vmatprep.mubr.bf16.mxu0 0
    %265 = vmatmul.mubr.bf16.gmra.mxu0 %v230
    %v266 = vpop.f32.mrf.mxu0
    %v267 = vadd.f32 %v220, %v266
    %v268 = vpop.f32.mrf.mxu0
    %v269 = vpop.f32.mrf.mxu0
    %v270 = vadd.f32 %v220, %v269
    %v271 = vpop.f32.mrf.mxu0
    %272 = vdwg.mxu0
    %v273 = vpack.c.bf16 %v270, %v267
    %v275 = vunpack.c.l.b16 %v273
    %v276 = vunpack.c.h.b16 %v273
    %v277 = vpack.c.b16 %v275, %v275
    %v278 = vpack.c.b16 %v276, %v276
    %281 = vst [vmem:[#allocation2] sm:$0xf] %v277
    %282 = vst [vmem:[#allocation2 + $0x4] sm:$0xf] %v278
    // Predicated region
    $region30: #{tpu_custom_call.1} parent=1 // pred_check
      _
    $region31: #{tpu_custom_call.1} parent=1 // pred_check_branch
      %284 = sbr.rel (0) target = $region33
    $region32: #{tpu_custom_call.1} parent=1 // pred_region
      %s286 = ssub.s32 128, 128
      %287 = vsyncadd [#allocation3], %s286
      %s288 = sshll.u32 [#allocation2], 4
      %s289 = int_to_ptr.vmem [resolvable:$true] %s288
      %294 = dma.vmem_to_hbm [thread:$0]  %s289, 128, %s7, [#allocation3], 64, 64, 4
    $region33: #{tpu_custom_call.1} parent=1 // pred_fallthru
      _
    // Predicated region
    $region34: #{tpu_custom_call.1} parent=1 // pred_check
      _
    $region35: #{tpu_custom_call.1} parent=1 // pred_check_branch
      %296 = sbr.rel (0) target = $region37
    $region36: #{tpu_custom_call.1} parent=1 // pred_region
      %297 = dma.done [#allocation3], 128
    $region37: #{tpu_custom_call.1} parent=1 // pred_fallthru
      _
    %298 = vsyncpa [#allocation3], 1

</llo_original>
